<compile_context>
chip_gen: v6e
topology: v6e:2x2x1
jax: 0.10.0
libtpu: 0.0.40
codegen_flags: <defaults>
</compile_context>

<pallas_src>
import jax
import jax.numpy as jnp
from jax.experimental import pallas as pl
from jax.experimental.pallas import tpu as pltpu


def _round_up(x: int, m: int) -> int:
    return ((x + m - 1) // m) * m


def _cdiv(a: int, b: int) -> int:
    return -(-a // b)


def _make_fused_mlp_kernel(n_layers, has_output_bias, compute_dtype, act_dtype):
    """x -> [tanh(x @ Wi + bi)] * (n_layers-1) -> x @ Wlast (+ blast)."""
    n_biases = n_layers if has_output_bias else n_layers - 1

    def kernel(*refs):
        x_ref = refs[0]
        w_refs = refs[1:1 + n_layers]
        b_refs = refs[1 + n_layers:1 + n_layers + n_biases]
        o_ref = refs[1 + n_layers + n_biases]

        # Static layer list is unrolled; the activation never leaves vregs/VMEM.
        t = x_ref[...]
        for li in range(n_layers - 1):
            y = jnp.dot(t.astype(compute_dtype), w_refs[li][...],
                        preferred_element_type=jnp.float32)
            # bias-add + tanh in act_dtype (bf16 on v6e/v7x halves the binding
            # EUP/VPU work; keep f32 on v5e).  Dropout p=0.0 -> identity.
            t = jnp.tanh(y.astype(act_dtype) + b_refs[li][...])
        y = jnp.dot(t.astype(compute_dtype), w_refs[-1][...],
                    preferred_element_type=jnp.float32)
        if has_output_bias:
            y = y + b_refs[-1][...]          # output bias kept in f32
        o_ref[...] = y.astype(o_ref.dtype)

    return kernel


class MultiLayerPerceptronPallas:
    """Mirror of the PyTorch MultiLayerPerceptron forward pass (tanh activation)."""

    def __init__(self, in_dim, out_dim, hidden_layers, key,
                 dropout=0.0, output_bias=True, dtype=jnp.float32,
                 compute_dtype=None, activation_dtype=None, max_batch_tile=512):
        # TODO(synk): dropout > 0 (training-mode RNG mask) not implemented.
        assert dropout == 0.0
        # TODO(synk): only the default nn.Tanh activation and default nn.Linear
        # init are implemented (no orthogonal init_weights_gain path).
        self.in_dim = int(in_dim)
        self.out_dim = int(out_dim)
        self.layers = [self.in_dim] + list(hidden_layers) + [self.out_dim]
        self.output_bias = bool(output_bias)
        self.dtype = dtype
        # compute_dtype=jnp.bfloat16 -> bf16 MXU operands (f32 accumulation);
        # recommended for v6e/v7x.  Default f32 keeps 1e-5 parity and is the
        # safe choice on v5e (no bf16 VPU/EUP).
        self.compute_dtype = jnp.dtype(dtype if compute_dtype is None else compute_dtype)
        self.activation_dtype = jnp.dtype(
            self.compute_dtype if activation_dtype is None else activation_dtype)
        self.max_batch_tile = int(max_batch_tile)
        self._single_buffer_weights = hasattr(pl, "Buffered")

        # Widths as the kernel sees them: raw in_dim (x is NOT feature-padded),
        # hidden/out widths lane-padded to multiples of 128.
        self.kernel_widths = [self.in_dim] + [_round_up(d, 128) for d in self.layers[1:]]

        n_layers = len(self.layers) - 1
        keys = jax.random.split(key, 2 * n_layers)

        # f32 master copies (PyTorch nn.Linear layout) -> exact reference.
        self.weights = []            # (out, in)
        self.biases = []             # (out,) or None
        # Kernel-layout params: pre-transposed + zero-padded ONCE at init.
        self.weights_padded = []     # (k_in, k_out) in compute_dtype
        self.biases_padded = []      # (1, k_out); hidden in act dtype, last in f32

        for li in range(n_layers):
            fan_in, fan_out = self.layers[li], self.layers[li + 1]
            k_in, k_out = self.kernel_widths[li], self.kernel_widths[li + 1]
            # nn.Linear default init: U(-1/sqrt(fan_in), +1/sqrt(fan_in)).
            bound = 1.0 / (fan_in ** 0.5)
            w = jax.random.uniform(keys[2 * li], (fan_out, fan_in),
                                   minval=-bound, maxval=bound, dtype=dtype)
            self.weights.append(w)

            w_p = jnp.zeros((k_in, k_out), dtype=self.compute_dtype)
            w_p = w_p.at[:fan_in, :fan_out].set(w.T.astype(self.compute_dtype))
            self.weights_padded.append(w_p)

            is_last = li == n_layers - 1
            if is_last and not self.output_bias:
                self.biases.append(None)
            else:
                b = jax.random.uniform(keys[2 * li + 1], (fan_out,),
                                       minval=-bound, maxval=bound, dtype=dtype)
                self.biases.append(b)
                b_dtype = jnp.float32 if is_last else self.activation_dtype
                b_p = jnp.zeros((1, k_out), dtype=b_dtype)
                b_p = b_p.at[0, :fan_out].set(b.astype(b_dtype))
                self.biases_padded.append(b_p)

    # ---------------------------------------------------------------- call
    def __call__(self, t):
        batch, in_dim = t.shape
        assert in_dim == self.in_dim
        out_dtype = t.dtype

        # Batch tile: near-equal tiles (minimize padded rows); multiple of 16
        # when the x tile is 16-bit (sublane packing), else 8; >= 2 grid steps
        # whenever the batch allows so ("parallel",) shards across v7x's 2 TCs.
        sub = 16 if jnp.dtype(self.compute_dtype).itemsize == 2 else 8
        min_tiles = 2 if batch >= 2 * sub else 1
        n_tiles = max(_cdiv(batch, self.max_batch_tile), min_tiles)
        tb = _round_up(_cdiv(batch, n_tiles), sub)
        n_tiles = _cdiv(batch, tb)
        padded_batch = n_tiles * tb

        # No feature-dim padding of x; batch pad + optional bf16 cast is a
        # single cheap producer op (fused by XLA), not a zeros().at[].set().
        x_in = t
        if x_in.dtype != self.compute_dtype:
            x_in = x_in.astype(self.compute_dtype)
        if padded_batch != batch:
            x_in = jnp.pad(x_in, ((0, padded_batch - batch), (0, 0)))

        try:
            out = self._forward_padded(x_in, tb, padded_batch, out_dtype,
                                       self._single_buffer_weights)
        except Exception:
            if not self._single_buffer_weights:
                raise
            # Fallback: installed jax rejected pipeline_mode=pl.Buffered(1).
            self._single_buffer_weights = False
            out = self._forward_padded(x_in, tb, padded_batch, out_dtype, False)

        return out[:batch, :self.out_dim]

    # ------------------------------------------------------------ internals
    def _forward_padded(self, x_in, tb, padded_batch, out_dtype,
                        single_buffer_weights):
        n_layers = len(self.weights_padded)
        out_pad = self.kernel_widths[-1]

        kernel = _make_fused_mlp_kernel(n_layers, self.output_bias,
                                        self.compute_dtype, self.activation_dtype)

        def const_spec(shape):
            # Grid-invariant tensors: constant index_map; single-buffering
            # halves resident weight VMEM (fits v5e's 16 MiB scoped default).
            if single_buffer_weights:
                return pl.BlockSpec(shape, lambda i: (0, 0),
                                    pipeline_mode=pl.Buffered(1))
            return pl.BlockSpec(shape, lambda i: (0, 0))

        in_specs = [pl.BlockSpec((tb, self.in_dim), lambda i: (i, 0))]
        in_specs += [const_spec(w.shape) for w in self.weights_padded]
        in_specs += [const_spec(b.shape) for b in self.biases_padded]

        # ---- Explicit VMEM budget instead of trusting the scoped default.
        w_bytes = sum(int(w.size) * w.dtype.itemsize for w in self.weights_padded)
        b_bytes = sum(int(b.size) * b.dtype.itemsize for b in self.biases_padded)
        w_factor = 1 if single_buffer_weights else 2
        act_bytes = 3 * tb * max(self.kernel_widths) * 4            # t / y temporaries (f32)
        needed = (2 * tb * self.in_dim * x_in.dtype.itemsize        # double-buffered x tile
                  + 2 * tb * out_pad * jnp.dtype(out_dtype).itemsize  # double-buffered out tile
                  + w_factor * (w_bytes + b_bytes) + act_bytes)
        vmem_limit = int(min(max(2 * needed, 16 << 20), 64 << 20))

        # ---- Cost estimate so XLA schedules the surrounding pad/slice well.
        flops = 2 * padded_batch * sum(
            self.kernel_widths[i] * self.kernel_widths[i + 1] for i in range(n_layers))
        transcendentals = padded_batch * sum(self.kernel_widths[1:-1])
        bytes_accessed = (int(x_in.size) * x_in.dtype.itemsize + w_bytes + b_bytes
                          + padded_batch * out_pad * jnp.dtype(out_dtype).itemsize)

        return pl.pallas_call(
            kernel,
            out_shape=jax.ShapeDtypeStruct((padded_batch, out_pad), out_dtype),
            grid=(padded_batch // tb,),
            in_specs=in_specs,
            out_specs=pl.BlockSpec((tb, out_pad), lambda i: (i, 0)),
            compiler_params=pltpu.CompilerParams(
                dimension_semantics=("parallel",),
                vmem_limit_bytes=vmem_limit),
            cost_estimate=pl.CostEstimate(flops=int(flops),
                                          transcendentals=int(transcendentals),
                                          bytes_accessed=int(bytes_accessed)),
        )(x_in, *self.weights_padded, *self.biases_padded)


def _reference_forward(mlp, t):
    """Pure-JAX f32 reference of the same forward pass (uses f32 master weights)."""
    t = t.astype(jnp.float32)
    n_layers = len(mlp.weights)
    for li in range(n_layers - 1):
        t = jnp.tanh(t @ mlp.weights[li].T.astype(jnp.float32)
                     + mlp.biases[li].astype(jnp.float32))
    y = t @ mlp.weights[-1].T.astype(jnp.float32)
    if mlp.biases[-1] is not None:
        y = y + mlp.biases[-1].astype(jnp.float32)
    return y


if __name__ == "__main__":
    key = jax.random.PRNGKey(0)
    k1, k2, k3, kx, kx2 = jax.random.split(key, 5)

    in_dim, hidden, out_dim = 16, [32, 32], 8

    # 1) Default f32 path, output bias, tiny batch (batch-pad + single tile).
    batch = 4
    x = jax.random.normal(kx, (batch, in_dim), dtype=jnp.float32)
    mlp = MultiLayerPerceptronPallas(in_dim, out_dim, hidden, k1,
                                     dropout=0.0, output_bias=True)
    y = jax.block_until_ready(mlp(x))
    assert y.shape == (batch, out_dim)
    assert jnp.allclose(y, _reference_forward(mlp, x), atol=1e-5, rtol=1e-5)

    # 2) f32 path, no output bias, multi-tile grid (exercises batch padding and
    #    the "parallel" batch axis sharding).
    batch2 = 40
    x2 = jax.random.normal(kx2, (batch2, in_dim), dtype=jnp.float32)
    mlp_nb = MultiLayerPerceptronPallas(in_dim, out_dim, hidden, k2,
                                        dropout=0.0, output_bias=False,
                                        max_batch_tile=16)
    y2 = jax.block_until_ready(mlp_nb(x2))
    assert y2.shape == (batch2, out_dim)
    assert jnp.allclose(y2, _reference_forward(mlp_nb, x2), atol=1e-5, rtol=1e-5)

    # 3) bf16 MXU-operand + bf16 tanh path (v6e/v7x production mode); f32
    #    master weights are kept, so compare against the f32 reference with a
    #    bf16-appropriate tolerance.
    mlp_bf16 = MultiLayerPerceptronPallas(in_dim, out_dim, hidden, k3,
                                          dropout=0.0, output_bias=True,
                                          compute_dtype=jnp.bfloat16)
    y3 = jax.block_until_ready(mlp_bf16(x))
    assert y3.shape == (batch, out_dim)
    assert jnp.allclose(y3, _reference_forward(mlp_bf16, x), atol=5e-2, rtol=5e-2)

    print("KERNEL_OK")
</pallas_src>

<mosaic_0001>
module attributes {stable_mosaic.version = 11 : i64} {
  func.func @kernel(%arg0: i32, %arg1: memref<8x16xf32, #tpu.memory_space<vmem>>, %arg2: memref<16x128xf32, #tpu.memory_space<vmem>>, %arg3: memref<128x128xf32, #tpu.memory_space<vmem>>, %arg4: memref<128x128xf32, #tpu.memory_space<vmem>>, %arg5: memref<1x128xf32, #tpu.memory_space<vmem>>, %arg6: memref<1x128xf32, #tpu.memory_space<vmem>>, %arg7: memref<1x128xf32, #tpu.memory_space<vmem>>, %arg8: memref<8x128xf32, #tpu.memory_space<vmem>>) attributes {dimension_semantics = [#tpu.dimension_semantics<parallel>], iteration_bounds = array<i64: 1>, scalar_prefetch = 0 : i64, scratch_operands = 0 : i64, tpu.core_type = #tpu.core_type<tc>, window_params = [{transform_indices = @transform_0, window_bounds = array<i64: 8, 16>}, {pipeline_mode = #tpu.pipeline_mode<synchronous>, transform_indices = @transform_1, window_bounds = array<i64: 16, 128>}, {pipeline_mode = #tpu.pipeline_mode<synchronous>, transform_indices = @transform_2, window_bounds = array<i64: 128, 128>}, {pipeline_mode = #tpu.pipeline_mode<synchronous>, transform_indices = @transform_3, window_bounds = array<i64: 128, 128>}, {pipeline_mode = #tpu.pipeline_mode<synchronous>, transform_indices = @transform_4, window_bounds = array<i64: 1, 128>}, {pipeline_mode = #tpu.pipeline_mode<synchronous>, transform_indices = @transform_5, window_bounds = array<i64: 1, 128>}, {pipeline_mode = #tpu.pipeline_mode<synchronous>, transform_indices = @transform_6, window_bounds = array<i64: 1, 128>}, {transform_indices = @transform_7, window_bounds = array<i64: 8, 128>}]} {
    %c0 = arith.constant 0 : index
    %c0_0 = arith.constant 0 : index
    %0 = vector.load %arg1[%c0, %c0_0] : memref<8x16xf32, #tpu.memory_space<vmem>>, vector<8x16xf32>
    %c0_1 = arith.constant 0 : index
    %c0_2 = arith.constant 0 : index
    %1 = vector.load %arg2[%c0_1, %c0_2] : memref<16x128xf32, #tpu.memory_space<vmem>>, vector<16x128xf32>
    %cst = arith.constant dense<0.000000e+00> : vector<8x128xf32>
    %2 = tpu.matmul %0, %1, %cst {dimension_numbers = #tpu.dot_dimension_numbers<[1], [0], [0], [1], [0, 0, 1, 1], [], []>} : vector<8x16xf32>, vector<16x128xf32>, vector<8x128xf32> -> vector<8x128xf32>
    %c0_3 = arith.constant 0 : index
    %c0_4 = arith.constant 0 : index
    %3 = vector.load %arg5[%c0_3, %c0_4] : memref<1x128xf32, #tpu.memory_space<vmem>>, vector<1x128xf32>
    %4 = vector.broadcast %3 : vector<1x128xf32> to vector<8x128xf32>
    %5 = arith.addf %2, %4 : vector<8x128xf32>
    %6 = math.tanh %5 : vector<8x128xf32>
    %c0_5 = arith.constant 0 : index
    %c0_6 = arith.constant 0 : index
    %7 = vector.load %arg3[%c0_5, %c0_6] : memref<128x128xf32, #tpu.memory_space<vmem>>, vector<128x128xf32>
    %cst_7 = arith.constant dense<0.000000e+00> : vector<8x128xf32>
    %8 = tpu.matmul %6, %7, %cst_7 {dimension_numbers = #tpu.dot_dimension_numbers<[1], [0], [0], [1], [0, 0, 1, 1], [], []>} : vector<8x128xf32>, vector<128x128xf32>, vector<8x128xf32> -> vector<8x128xf32>
    %c0_8 = arith.constant 0 : index
    %c0_9 = arith.constant 0 : index
    %9 = vector.load %arg6[%c0_8, %c0_9] : memref<1x128xf32, #tpu.memory_space<vmem>>, vector<1x128xf32>
    %10 = vector.broadcast %9 : vector<1x128xf32> to vector<8x128xf32>
    %11 = arith.addf %8, %10 : vector<8x128xf32>
    %12 = math.tanh %11 : vector<8x128xf32>
    %c0_10 = arith.constant 0 : index
    %c0_11 = arith.constant 0 : index
    %13 = vector.load %arg4[%c0_10, %c0_11] : memref<128x128xf32, #tpu.memory_space<vmem>>, vector<128x128xf32>
    %cst_12 = arith.constant dense<0.000000e+00> : vector<8x128xf32>
    %14 = tpu.matmul %12, %13, %cst_12 {dimension_numbers = #tpu.dot_dimension_numbers<[1], [0], [0], [1], [0, 0, 1, 1], [], []>} : vector<8x128xf32>, vector<128x128xf32>, vector<8x128xf32> -> vector<8x128xf32>
    %c0_13 = arith.constant 0 : index
    %c0_14 = arith.constant 0 : index
    %15 = vector.load %arg7[%c0_13, %c0_14] : memref<1x128xf32, #tpu.memory_space<vmem>>, vector<1x128xf32>
    %16 = vector.broadcast %15 : vector<1x128xf32> to vector<8x128xf32>
    %17 = arith.addf %14, %16 : vector<8x128xf32>
    %c0_15 = arith.constant 0 : index
    %c0_16 = arith.constant 0 : index
    %18 = vector.load %arg8[%c0_15, %c0_16] : memref<8x128xf32, #tpu.memory_space<vmem>>, vector<8x128xf32>
    tpu.vector_store %arg8[%c0_15, %c0_16], %17 {strides = array<i32>} : memref<8x128xf32, #tpu.memory_space<vmem>>, vector<8x128xf32>,
    return
  }
  func.func @transform_0(%arg0: i32) -> (i32, i32) {
    %c0_i32 = arith.constant 0 : i32
    %c0_i32_0 = arith.constant 0 : i32
    return %arg0, %c0_i32 : i32, i32
  }
  func.func @transform_1(%arg0: i32) -> (i32, i32) {
    %c0_i32 = arith.constant 0 : i32
    %c0_i32_0 = arith.constant 0 : i32
    %c0_i32_1 = arith.constant 0 : i32
    return %c0_i32, %c0_i32_0 : i32, i32
  }
  func.func @transform_2(%arg0: i32) -> (i32, i32) {
    %c0_i32 = arith.constant 0 : i32
    %c0_i32_0 = arith.constant 0 : i32
    %c0_i32_1 = arith.constant 0 : i32
    return %c0_i32, %c0_i32_0 : i32, i32
  }
  func.func @transform_3(%arg0: i32) -> (i32, i32) {
    %c0_i32 = arith.constant 0 : i32
    %c0_i32_0 = arith.constant 0 : i32
    %c0_i32_1 = arith.constant 0 : i32
    return %c0_i32, %c0_i32_0 : i32, i32
  }
  func.func @transform_4(%arg0: i32) -> (i32, i32) {
    %c0_i32 = arith.constant 0 : i32
    %c0_i32_0 = arith.constant 0 : i32
    %c0_i32_1 = arith.constant 0 : i32
    return %c0_i32, %c0_i32_0 : i32, i32
  }
  func.func @transform_5(%arg0: i32) -> (i32, i32) {
    %c0_i32 = arith.constant 0 : i32
    %c0_i32_0 = arith.constant 0 : i32
    %c0_i32_1 = arith.constant 0 : i32
    return %c0_i32, %c0_i32_0 : i32, i32
  }
  func.func @transform_6(%arg0: i32) -> (i32, i32) {
    %c0_i32 = arith.constant 0 : i32
    %c0_i32_0 = arith.constant 0 : i32
    %c0_i32_1 = arith.constant 0 : i32
    return %c0_i32, %c0_i32_0 : i32, i32
  }
  func.func @transform_7(%arg0: i32) -> (i32, i32) {
    %c0_i32 = arith.constant 0 : i32
    %c0_i32_0 = arith.constant 0 : i32
    return %arg0, %c0_i32 : i32, i32
  }
}

module attributes {stable_mosaic.version = 11 : i64} {
  func.func @kernel(%arg0: i32, %arg1: memref<8x16xf32, #tpu.memory_space<vmem>>, %arg2: memref<16x128xf32, #tpu.memory_space<vmem>>, %arg3: memref<128x128xf32, #tpu.memory_space<vmem>>, %arg4: memref<128x128xf32, #tpu.memory_space<vmem>>, %arg5: memref<1x128xf32, #tpu.memory_space<vmem>>, %arg6: memref<1x128xf32, #tpu.memory_space<vmem>>, %arg7: memref<1x128xf32, #tpu.memory_space<vmem>>, %arg8: memref<8x128xf32, #tpu.memory_space<vmem>>) attributes {dimension_semantics = [#tpu.dimension_semantics<parallel>], iteration_bounds = array<i64: 1>, scalar_prefetch = 0 : i64, scratch_operands = 0 : i64, tpu.core_type = #tpu.core_type<tc>, window_params = [{transform_indices = @transform_0, window_bounds = array<i64: 8, 16>}, {pipeline_mode = #tpu.pipeline_mode<synchronous>, transform_indices = @transform_1, window_bounds = array<i64: 16, 128>}, {pipeline_mode = #tpu.pipeline_mode<synchronous>, transform_indices = @transform_2, window_bounds = array<i64: 128, 128>}, {pipeline_mode = #tpu.pipeline_mode<synchronous>, transform_indices = @transform_3, window_bounds = array<i64: 128, 128>}, {pipeline_mode = #tpu.pipeline_mode<synchronous>, transform_indices = @transform_4, window_bounds = array<i64: 1, 128>}, {pipeline_mode = #tpu.pipeline_mode<synchronous>, transform_indices = @transform_5, window_bounds = array<i64: 1, 128>}, {pipeline_mode = #tpu.pipeline_mode<synchronous>, transform_indices = @transform_6, window_bounds = array<i64: 1, 128>}, {transform_indices = @transform_7, window_bounds = array<i64: 8, 128>}]} {
    %c0 = arith.constant 0 : index
    %c0_0 = arith.constant 0 : index
    %0 = vector.load %arg1[%c0, %c0_0] : memref<8x16xf32, #tpu.memory_space<vmem>>, vector<8x16xf32>
    %c0_1 = arith.constant 0 : index
    %c0_2 = arith.constant 0 : index
    %1 = vector.load %arg2[%c0_1, %c0_2] : memref<16x128xf32, #tpu.memory_space<vmem>>, vector<16x128xf32>
    %cst = arith.constant dense<0.000000e+00> : vector<8x128xf32>
    %2 = tpu.matmul %0, %1, %cst {dimension_numbers = #tpu.dot_dimension_numbers<[1], [0], [0], [1], [0, 0, 1, 1], [], []>} : vector<8x16xf32>, vector<16x128xf32>, vector<8x128xf32> -> vector<8x128xf32>
    %c0_3 = arith.constant 0 : index
    %c0_4 = arith.constant 0 : index
    %3 = vector.load %arg5[%c0_3, %c0_4] : memref<1x128xf32, #tpu.memory_space<vmem>>, vector<1x128xf32>
    %4 = vector.broadcast %3 : vector<1x128xf32> to vector<8x128xf32>
    %5 = arith.addf %2, %4 : vector<8x128xf32>
    %6 = math.tanh %5 : vector<8x128xf32>
    %c0_5 = arith.constant 0 : index
    %c0_6 = arith.constant 0 : index
    %7 = vector.load %arg3[%c0_5, %c0_6] : memref<128x128xf32, #tpu.memory_space<vmem>>, vector<128x128xf32>
    %cst_7 = arith.constant dense<0.000000e+00> : vector<8x128xf32>
    %8 = tpu.matmul %6, %7, %cst_7 {dimension_numbers = #tpu.dot_dimension_numbers<[1], [0], [0], [1], [0, 0, 1, 1], [], []>} : vector<8x128xf32>, vector<128x128xf32>, vector<8x128xf32> -> vector<8x128xf32>
    %c0_8 = arith.constant 0 : index
    %c0_9 = arith.constant 0 : index
    %9 = vector.load %arg6[%c0_8, %c0_9] : memref<1x128xf32, #tpu.memory_space<vmem>>, vector<1x128xf32>
    %10 = vector.broadcast %9 : vector<1x128xf32> to vector<8x128xf32>
    %11 = arith.addf %8, %10 : vector<8x128xf32>
    %12 = math.tanh %11 : vector<8x128xf32>
    %c0_10 = arith.constant 0 : index
    %c0_11 = arith.constant 0 : index
    %13 = vector.load %arg4[%c0_10, %c0_11] : memref<128x128xf32, #tpu.memory_space<vmem>>, vector<128x128xf32>
    %cst_12 = arith.constant dense<0.000000e+00> : vector<8x128xf32>
    %14 = tpu.matmul %12, %13, %cst_12 {dimension_numbers = #tpu.dot_dimension_numbers<[1], [0], [0], [1], [0, 0, 1, 1], [], []>} : vector<8x128xf32>, vector<128x128xf32>, vector<8x128xf32> -> vector<8x128xf32>
    %c0_13 = arith.constant 0 : index
    %c0_14 = arith.constant 0 : index
    %15 = vector.load %arg7[%c0_13, %c0_14] : memref<1x128xf32, #tpu.memory_space<vmem>>, vector<1x128xf32>
    %16 = vector.broadcast %15 : vector<1x128xf32> to vector<8x128xf32>
    %17 = arith.addf %14, %16 : vector<8x128xf32>
    %c0_15 = arith.constant 0 : index
    %c0_16 = arith.constant 0 : index
    %18 = vector.load %arg8[%c0_15, %c0_16] : memref<8x128xf32, #tpu.memory_space<vmem>>, vector<8x128xf32>
    tpu.vector_store %arg8[%c0_15, %c0_16], %17 {strides = array<i32>} : memref<8x128xf32, #tpu.memory_space<vmem>>, vector<8x128xf32>,
    return
  }
  func.func @transform_0(%arg0: i32) -> (i32, i32) {
    %c0_i32 = arith.constant 0 : i32
    %c0_i32_0 = arith.constant 0 : i32
    return %arg0, %c0_i32 : i32, i32
  }
  func.func @transform_1(%arg0: i32) -> (i32, i32) {
    %c0_i32 = arith.constant 0 : i32
    %c0_i32_0 = arith.constant 0 : i32
    %c0_i32_1 = arith.constant 0 : i32
    return %c0_i32, %c0_i32_0 : i32, i32
  }
  func.func @transform_2(%arg0: i32) -> (i32, i32) {
    %c0_i32 = arith.constant 0 : i32
    %c0_i32_0 = arith.constant 0 : i32
    %c0_i32_1 = arith.constant 0 : i32
    return %c0_i32, %c0_i32_0 : i32, i32
  }
  func.func @transform_3(%arg0: i32) -> (i32, i32) {
    %c0_i32 = arith.constant 0 : i32
    %c0_i32_0 = arith.constant 0 : i32
    %c0_i32_1 = arith.constant 0 : i32
    return %c0_i32, %c0_i32_0 : i32, i32
  }
  func.func @transform_4(%arg0: i32) -> (i32, i32) {
    %c0_i32 = arith.constant 0 : i32
    %c0_i32_0 = arith.constant 0 : i32
    %c0_i32_1 = arith.constant 0 : i32
    return %c0_i32, %c0_i32_0 : i32, i32
  }
  func.func @transform_5(%arg0: i32) -> (i32, i32) {
    %c0_i32 = arith.constant 0 : i32
    %c0_i32_0 = arith.constant 0 : i32
    %c0_i32_1 = arith.constant 0 : i32
    return %c0_i32, %c0_i32_0 : i32, i32
  }
  func.func @transform_6(%arg0: i32) -> (i32, i32) {
    %c0_i32 = arith.constant 0 : i32
    %c0_i32_0 = arith.constant 0 : i32
    %c0_i32_1 = arith.constant 0 : i32
    return %c0_i32, %c0_i32_0 : i32, i32
  }
  func.func @transform_7(%arg0: i32) -> (i32, i32) {
    %c0_i32 = arith.constant 0 : i32
    %c0_i32_0 = arith.constant 0 : i32
    return %arg0, %c0_i32 : i32, i32
  }
}

</mosaic_0001>

<llo_original>
// kernel: tpu_custom_call.1
$region0: #{tpu_custom_call.1}
  #allocation0 [shape = 'u32[]', space=smem, size = 0x4, offset = 0x4, fixed_abs, tag = 'smem constant byte address 0x4 - core index']
  #allocation1 [shape = 'u32[144,128]{1,0:T(1,128)}', space=vmem, size = 0x12000, scoped, tag = 'internal scratch']
  %s0 = inlined_call_operand.hbm [shape: f32[8,16], index: 0, kind: input, shape index: {}]
  %s1 = inlined_call_operand.hbm [shape: f32[16,128], index: 1, kind: input, shape index: {}]
  %s2 = inlined_call_operand.hbm [shape: f32[128,128], index: 2, kind: input, shape index: {}]
  %s3 = inlined_call_operand.hbm [shape: f32[128,128], index: 3, kind: input, shape index: {}]
  %s4 = inlined_call_operand.vmem [shape: f32[1,128], index: 4, kind: input, shape index: {}]
  %s5 = inlined_call_operand.vmem [shape: f32[1,128], index: 5, kind: input, shape index: {}]
  %s6 = inlined_call_operand.vmem [shape: f32[1,128], index: 6, kind: input, shape index: {}]
  %s7 = inlined_call_operand.hbm [shape: f32[8,128], index: 7, kind: output, shape index: {}]
  %s8 = sld [smem:[#allocation0]]
  $region54: #{tpu_custom_call.1} parent=0
    _
  %s10 = ssub.s32 1, %s8
  %s11 = scalar_select 0, %s10, %s8
  $region1: #{tpu_custom_call.1} parent=0
    #allocation2 [shape = 'u8[4096]{0}', space=vmem, size = 0x1000, scoped, tag = 'input window, operand 0, single buffered']
    #allocation3 [shape = 's32[1]{0}', space=sflag, size = 0x4, scoped, tag = 'scoped memory for tpu_custom_call.1']
    #allocation4 [shape = 's32[1]{0}', space=sflag, size = 0x4, scoped, tag = 'scoped memory for tpu_custom_call.1']
    #allocation5 [shape = 'u8[8192]{0}', space=vmem, size = 0x2000, scoped, tag = 'input window, operand 1, single buffered']
    #allocation6 [shape = 's32[1]{0}', space=sflag, size = 0x4, scoped, tag = 'scoped memory for tpu_custom_call.1']
    #allocation7 [shape = 'u8[65536]{0}', space=vmem, size = 0x10000, scoped, tag = 'input window, operand 2, single buffered']
    #allocation8 [shape = 'u8[65536]{0}', space=vmem, size = 0x10000, scoped, tag = 'input window, operand 3, single buffered']
    #allocation9 [shape = 's32[1]{0}', space=sflag, size = 0x4, scoped, tag = 'scoped memory for tpu_custom_call.1']
    #allocation10 [shape = 'u8[4096]{0}', space=vmem, size = 0x1000, scoped, tag = 'output window, operand 0, single buffered']
    %12 = vsyncpa [#allocation3], 0
    %13 = vsyncpa [#allocation6], 0
    %14 = vsyncpa [#allocation9], 0
    %15 = vsyncpa [#allocation4], 0
    // Predicated region
    $region2: #{tpu_custom_call.1} parent=1 // pred_check
      _
    $region3: #{tpu_custom_call.1} parent=1 // pred_check_branch
      %17 = sbr.rel (0) target = $region5
    $region4: #{tpu_custom_call.1} parent=1 // pred_region
      %s19 = ssub.s32 128, 128
      %20 = vsyncadd [#allocation3], %s19
      %s22 = sshll.u32 [#allocation2], 4
      %s23 = int_to_ptr.vmem [resolvable:$true] %s22
      %25 = dma.hbm_to_vmem [thread:$0]  %s0, 128, %s23, [#allocation3]
    $region5: #{tpu_custom_call.1} parent=1 // pred_fallthru
      _
    // Predicated region
    $region6: #{tpu_custom_call.1} parent=1 // pred_check
      _
    $region7: #{tpu_custom_call.1} parent=1 // pred_check_branch
      %27 = sbr.rel (0) target = $region9
    $region8: #{tpu_custom_call.1} parent=1 // pred_region
      %s29 = ssub.s32 256, 256
      %30 = vsyncadd [#allocation6], %s29
      %s31 = sshll.u32 [#allocation5], 4
      %s32 = int_to_ptr.vmem [resolvable:$true] %s31
      %37 = dma.hbm_to_vmem [thread:$0]  %s1, 256, %s32, [#allocation6], 128, 128, 8
    $region9: #{tpu_custom_call.1} parent=1 // pred_fallthru
      _
    // Predicated region
    $region10: #{tpu_custom_call.1} parent=1 // pred_check
      _
    $region11: #{tpu_custom_call.1} parent=1 // pred_check_branch
      %39 = sbr.rel (0) target = $region13
    $region12: #{tpu_custom_call.1} parent=1 // pred_region
      %s41 = ssub.s32 2048, 2048
      %42 = vsyncadd [#allocation6], %s41
      %s43 = sshll.u32 [#allocation7], 4
      %s44 = int_to_ptr.vmem [resolvable:$true] %s43
      %49 = dma.hbm_to_vmem [thread:$0]  %s2, 2048, %s44, [#allocation6], 128, 128, 8
    $region13: #{tpu_custom_call.1} parent=1 // pred_fallthru
      _
    // Predicated region
    $region14: #{tpu_custom_call.1} parent=1 // pred_check
      _
    $region15: #{tpu_custom_call.1} parent=1 // pred_check_branch
      %51 = sbr.rel (0) target = $region17
    $region16: #{tpu_custom_call.1} parent=1 // pred_region
      %s53 = ssub.s32 2048, 2048
      %54 = vsyncadd [#allocation9], %s53
      %s55 = sshll.u32 [#allocation8], 4
      %s56 = int_to_ptr.vmem [resolvable:$true] %s55
      %61 = dma.hbm_to_vmem [thread:$0]  %s3, 2048, %s56, [#allocation9], 128, 128, 8
    $region17: #{tpu_custom_call.1} parent=1 // pred_fallthru
      _
    // Predicated region
    $region18: #{tpu_custom_call.1} parent=1 // pred_check
      _
    $region19: #{tpu_custom_call.1} parent=1 // pred_check_branch
      %63 = sbr.rel (0) target = $region21
    $region20: #{tpu_custom_call.1} parent=1 // pred_region
      _
    $region21: #{tpu_custom_call.1} parent=1 // pred_fallthru
      _
    // Predicated region
    $region22: #{tpu_custom_call.1} parent=1 // pred_check
      _
    $region23: #{tpu_custom_call.1} parent=1 // pred_check_branch
      %65 = sbr.rel (0) target = $region25
    $region24: #{tpu_custom_call.1} parent=1 // pred_region
      _
    $region25: #{tpu_custom_call.1} parent=1 // pred_fallthru
      _
    // Predicated region
    $region26: #{tpu_custom_call.1} parent=1 // pred_check
      _
    $region27: #{tpu_custom_call.1} parent=1 // pred_check_branch
      %67 = sbr.rel (0) target = $region29
    $region28: #{tpu_custom_call.1} parent=1 // pred_region
      _
    $region29: #{tpu_custom_call.1} parent=1 // pred_fallthru
      _
    // Predicated region
    $region30: #{tpu_custom_call.1} parent=1 // pred_check
      _
    $region31: #{tpu_custom_call.1} parent=1 // pred_check_branch
      %69 = sbr.rel (0) target = $region33
    $region32: #{tpu_custom_call.1} parent=1 // pred_region
      %70 = dma.done [#allocation3], 128
    $region33: #{tpu_custom_call.1} parent=1 // pred_fallthru
      _
    // Predicated region
    $region34: #{tpu_custom_call.1} parent=1 // pred_check
      _
    $region35: #{tpu_custom_call.1} parent=1 // pred_check_branch
      %72 = sbr.rel (0) target = $region37
    $region36: #{tpu_custom_call.1} parent=1 // pred_region
      %73 = dma.done [#allocation6], 256
    $region37: #{tpu_custom_call.1} parent=1 // pred_fallthru
      _
    // Predicated region
    $region38: #{tpu_custom_call.1} parent=1 // pred_check
      _
    $region39: #{tpu_custom_call.1} parent=1 // pred_check_branch
      %75 = sbr.rel (0) target = $region41
    $region40: #{tpu_custom_call.1} parent=1 // pred_region
      %76 = dma.done [#allocation6], 2048
    $region41: #{tpu_custom_call.1} parent=1 // pred_fallthru
      _
    // Predicated region
    $region42: #{tpu_custom_call.1} parent=1 // pred_check
      _
    $region43: #{tpu_custom_call.1} parent=1 // pred_check_branch
      %78 = sbr.rel (0) target = $region45
    $region44: #{tpu_custom_call.1} parent=1 // pred_region
      %79 = dma.done [#allocation9], 2048
    $region45: #{tpu_custom_call.1} parent=1 // pred_fallthru
      _
    %v80 = vld [vmem:[#allocation2] sm:$0xff]
    %v81 = vld [vmem:[#allocation5] sm:$0xff]
    %v82 = vld [vmem:[#allocation5 + $0x8] sm:$0xff]
    %v83 = vld [vmem:[%s4] sm:$0x1]
    %v85 = vlaneseq
    %v86 = vshrl.u32 %v85, 7
    %v87 = vsub.s32 0, %v86
    %v88 = vrot.slane %v83, %v87
    %vm90 = vcmask 130048
    %v92 = vsel %vm90, %v80, 0
    %94 = vmatprep.subr.mxu0 0.0
    %95 = vmatpush1.msra.mxu0 0.0
    %96 = vmatprep.subr.mxu0 0.0
    %97 = vmatpush1.msra.mxu0 0.0
    %98 = vmatprep.subr.mxu0 0.0
    %99 = vmatpush1.msra.mxu0 0.0
    %100 = vmatprep.subr.mxu0 0.0
    %101 = vmatpush1.msra.mxu0 0.0
    %102 = vmatprep.subr.mxu0 0.0
    %103 = vmatpush1.msra.mxu0 0.0
    %104 = vmatprep.subr.mxu0 0.0
    %105 = vmatpush1.msra.mxu0 0.0
    %106 = vmatprep.subr.mxu0 0.0
    %107 = vmatpush1.msra.mxu0 0.0
    %108 = vmatprep.subr.mxu0 0.0
    %109 = vmatpush1.msra.mxu0 0.0
    %110 = vmatprep.subr.mxu0 0.0
    %111 = vmatpush1.msra.mxu0 0.0
    %112 = vmatprep.subr.mxu0 0.0
    %113 = vmatpush1.msra.mxu0 0.0
    %114 = vmatprep.subr.mxu0 0.0
    %115 = vmatpush1.msra.mxu0 0.0
    %116 = vmatprep.subr.mxu0 0.0
    %117 = vmatpush1.msra.mxu0 0.0
    %118 = vmatprep.subr.mxu0 0.0
    %119 = vmatpush1.msra.mxu0 0.0
    %120 = vmatprep.subr.mxu0 0.0
    %121 = vmatpush1.msra.mxu0 0.0
    %122 = vmatprep.subr.mxu0 0.0
    %123 = vmatpush1.msra.mxu0 %v82
    %124 = vmatprep.subr.mxu0 0.0
    %125 = vmatpush1.msra.mxu0 %v81
    %126 = vmatprep.subr.mxu0 0.0
    %127 = vmatpush2.msra.mxu0 0.0
    %128 = vmatprep.subr.mxu0 0.0
    %129 = vmatpush2.msra.mxu0 0.0
    %130 = vmatprep.subr.mxu0 0.0
    %131 = vmatpush2.msra.mxu0 0.0
    %132 = vmatprep.subr.mxu0 0.0
    %133 = vmatpush2.msra.mxu0 0.0
    %134 = vmatprep.subr.mxu0 0.0
    %135 = vmatpush2.msra.mxu0 0.0
    %136 = vmatprep.subr.mxu0 0.0
    %137 = vmatpush2.msra.mxu0 0.0
    %138 = vmatprep.subr.mxu0 0.0
    %139 = vmatpush2.msra.mxu0 0.0
    %140 = vmatprep.subr.mxu0 0.0
    %141 = vmatpush2.msra.mxu0 0.0
    %142 = vmatprep.subr.mxu0 0.0
    %143 = vmatpush2.msra.mxu0 0.0
    %144 = vmatprep.subr.mxu0 0.0
    %145 = vmatpush2.msra.mxu0 0.0
    %146 = vmatprep.subr.mxu0 0.0
    %147 = vmatpush2.msra.mxu0 0.0
    %148 = vmatprep.subr.mxu0 0.0
    %149 = vmatpush2.msra.mxu0 0.0
    %150 = vmatprep.subr.mxu0 0.0
    %151 = vmatpush2.msra.mxu0 0.0
    %152 = vmatprep.subr.mxu0 0.0
    %153 = vmatpush2.msra.mxu0 0.0
    %154 = vmatprep.subr.mxu0 0.0
    %155 = vmatpush2.msra.mxu0 0.0
    %156 = vmatprep.subr.mxu0 0.0
    %157 = vmatpush2.msra.mxu0 0.0
    %158 = vmatprep.mubr.f32.mxu0 0.0
    %159 = vmatmul.mubr.f32.gmra.mxu0 %v92
    %v160 = vpop.f32.mrf.mxu0
    %v161 = vadd.f32 %v88, %v160
    %v162 = vpop.f32.mrf.mxu0
    %163 = vdwg.mxu0
    %v164 = vtanh.pop %v161
    %v165 = vld [vmem:[#allocation7] sm:$0xff]
    %v166 = vld [vmem:[#allocation7 + $0x8] sm:$0xff]
    %v167 = vld [vmem:[#allocation7 + $0x10] sm:$0xff]
    %v168 = vld [vmem:[#allocation7 + $0x18] sm:$0xff]
    %v169 = vld [vmem:[#allocation7 + $0x20] sm:$0xff]
    %v170 = vld [vmem:[#allocation7 + $0x28] sm:$0xff]
    %v171 = vld [vmem:[#allocation7 + $0x30] sm:$0xff]
    %v172 = vld [vmem:[#allocation7 + $0x38] sm:$0xff]
    %v173 = vld [vmem:[#allocation7 + $0x40] sm:$0xff]
    %v174 = vld [vmem:[#allocation7 + $0x48] sm:$0xff]
    %v175 = vld [vmem:[#allocation7 + $0x50] sm:$0xff]
    %v176 = vld [vmem:[#allocation7 + $0x58] sm:$0xff]
    %v177 = vld [vmem:[#allocation7 + $0x60] sm:$0xff]
    %v178 = vld [vmem:[#allocation7 + $0x68] sm:$0xff]
    %v179 = vld [vmem:[#allocation7 + $0x70] sm:$0xff]
    %v180 = vld [vmem:[#allocation7 + $0x78] sm:$0xff]
    %v181 = vld [vmem:[%s5] sm:$0x1]
    %v183 = vlaneseq
    %v184 = vshrl.u32 %v183, 7
    %v185 = vsub.s32 0, %v184
    %v186 = vrot.slane %v181, %v185
    %188 = vmatprep.subr.mxu0 0.0
    %189 = vmatpush1.msra.mxu0 %v180
    %190 = vmatprep.subr.mxu0 0.0
    %191 = vmatpush1.msra.mxu0 %v179
    %192 = vmatprep.subr.mxu0 0.0
    %193 = vmatpush1.msra.mxu0 %v178
    %194 = vmatprep.subr.mxu0 0.0
    %195 = vmatpush1.msra.mxu0 %v177
    %196 = vmatprep.subr.mxu0 0.0
    %197 = vmatpush1.msra.mxu0 %v176
    %198 = vmatprep.subr.mxu0 0.0
    %199 = vmatpush1.msra.mxu0 %v175
    %200 = vmatprep.subr.mxu0 0.0
    %201 = vmatpush1.msra.mxu0 %v174
    %202 = vmatprep.subr.mxu0 0.0
    %203 = vmatpush1.msra.mxu0 %v173
    %204 = vmatprep.subr.mxu0 0.0
    %205 = vmatpush1.msra.mxu0 %v172
    %206 = vmatprep.subr.mxu0 0.0
    %207 = vmatpush1.msra.mxu0 %v171
    %208 = vmatprep.subr.mxu0 0.0
    %209 = vmatpush1.msra.mxu0 %v170
    %210 = vmatprep.subr.mxu0 0.0
    %211 = vmatpush1.msra.mxu0 %v169
    %212 = vmatprep.subr.mxu0 0.0
    %213 = vmatpush1.msra.mxu0 %v168
    %214 = vmatprep.subr.mxu0 0.0
    %215 = vmatpush1.msra.mxu0 %v167
    %216 = vmatprep.subr.mxu0 0.0
    %217 = vmatpush1.msra.mxu0 %v166
    %218 = vmatprep.subr.mxu0 0.0
    %219 = vmatpush1.msra.mxu0 %v165
    %220 = vmatprep.subr.mxu0 0.0
    %221 = vmatpush2.msra.mxu0 0.0
    %222 = vmatprep.subr.mxu0 0.0
    %223 = vmatpush2.msra.mxu0 0.0
    %224 = vmatprep.subr.mxu0 0.0
    %225 = vmatpush2.msra.mxu0 0.0
    %226 = vmatprep.subr.mxu0 0.0
    %227 = vmatpush2.msra.mxu0 0.0
    %228 = vmatprep.subr.mxu0 0.0
    %229 = vmatpush2.msra.mxu0 0.0
    %230 = vmatprep.subr.mxu0 0.0
    %231 = vmatpush2.msra.mxu0 0.0
    %232 = vmatprep.subr.mxu0 0.0
    %233 = vmatpush2.msra.mxu0 0.0
    %234 = vmatprep.subr.mxu0 0.0
    %235 = vmatpush2.msra.mxu0 0.0
    %236 = vmatprep.subr.mxu0 0.0
    %237 = vmatpush2.msra.mxu0 0.0
    %238 = vmatprep.subr.mxu0 0.0
    %239 = vmatpush2.msra.mxu0 0.0
    %240 = vmatprep.subr.mxu0 0.0
    %241 = vmatpush2.msra.mxu0 0.0
    %242 = vmatprep.subr.mxu0 0.0
    %243 = vmatpush2.msra.mxu0 0.0
    %244 = vmatprep.subr.mxu0 0.0
    %245 = vmatpush2.msra.mxu0 0.0
    %246 = vmatprep.subr.mxu0 0.0
    %247 = vmatpush2.msra.mxu0 0.0
    %248 = vmatprep.subr.mxu0 0.0
    %249 = vmatpush2.msra.mxu0 0.0
    %250 = vmatprep.subr.mxu0 0.0
    %251 = vmatpush2.msra.mxu0 0.0
    %252 = vmatprep.mubr.f32.mxu0 0.0
    %253 = vmatmul.mubr.f32.gmra.mxu0 %v164
    %v254 = vpop.f32.mrf.mxu0
    %v255 = vadd.f32 %v186, %v254
    %v256 = vpop.f32.mrf.mxu0
    %257 = vdwg.mxu0
    %v258 = vtanh.pop %v255
    %v259 = vld [vmem:[#allocation8] sm:$0xff]
    %v260 = vld [vmem:[#allocation8 + $0x8] sm:$0xff]
    %v261 = vld [vmem:[#allocation8 + $0x10] sm:$0xff]
    %v262 = vld [vmem:[#allocation8 + $0x18] sm:$0xff]
    %v263 = vld [vmem:[#allocation8 + $0x20] sm:$0xff]
    %v264 = vld [vmem:[#allocation8 + $0x28] sm:$0xff]
    %v265 = vld [vmem:[#allocation8 + $0x30] sm:$0xff]
    %v266 = vld [vmem:[#allocation8 + $0x38] sm:$0xff]
    %v267 = vld [vmem:[#allocation8 + $0x40] sm:$0xff]
    %v268 = vld [vmem:[#allocation8 + $0x48] sm:$0xff]
    %v269 = vld [vmem:[#allocation8 + $0x50] sm:$0xff]
    %v270 = vld [vmem:[#allocation8 + $0x58] sm:$0xff]
    %v271 = vld [vmem:[#allocation8 + $0x60] sm:$0xff]
    %v272 = vld [vmem:[#allocation8 + $0x68] sm:$0xff]
    %v273 = vld [vmem:[#allocation8 + $0x70] sm:$0xff]
    %v274 = vld [vmem:[#allocation8 + $0x78] sm:$0xff]
    %v275 = vld [vmem:[%s6] sm:$0x1]
    %v277 = vlaneseq
    %v278 = vshrl.u32 %v277, 7
    %v279 = vsub.s32 0, %v278
    %v280 = vrot.slane %v275, %v279
    %282 = vmatprep.subr.mxu0 0.0
    %283 = vmatpush1.msra.mxu0 %v274
    %284 = vmatprep.subr.mxu0 0.0
    %285 = vmatpush1.msra.mxu0 %v273
    %286 = vmatprep.subr.mxu0 0.0
    %287 = vmatpush1.msra.mxu0 %v272
    %288 = vmatprep.subr.mxu0 0.0
    %289 = vmatpush1.msra.mxu0 %v271
    %290 = vmatprep.subr.mxu0 0.0
    %291 = vmatpush1.msra.mxu0 %v270
    %292 = vmatprep.subr.mxu0 0.0
    %293 = vmatpush1.msra.mxu0 %v269
    %294 = vmatprep.subr.mxu0 0.0
    %295 = vmatpush1.msra.mxu0 %v268
    %296 = vmatprep.subr.mxu0 0.0
    %297 = vmatpush1.msra.mxu0 %v267
    %298 = vmatprep.subr.mxu0 0.0
    %299 = vmatpush1.msra.mxu0 %v266
    %300 = vmatprep.subr.mxu0 0.0
    %301 = vmatpush1.msra.mxu0 %v265
    %302 = vmatprep.subr.mxu0 0.0
    %303 = vmatpush1.msra.mxu0 %v264
    %304 = vmatprep.subr.mxu0 0.0
    %305 = vmatpush1.msra.mxu0 %v263
    %306 = vmatprep.subr.mxu0 0.0
    %307 = vmatpush1.msra.mxu0 %v262
    %308 = vmatprep.subr.mxu0 0.0
    %309 = vmatpush1.msra.mxu0 %v261
    %310 = vmatprep.subr.mxu0 0.0
    %311 = vmatpush1.msra.mxu0 %v260
    %312 = vmatprep.subr.mxu0 0.0
    %313 = vmatpush1.msra.mxu0 %v259
    %314 = vmatprep.subr.mxu0 0.0
    %315 = vmatpush2.msra.mxu0 0.0
    %316 = vmatprep.subr.mxu0 0.0
    %317 = vmatpush2.msra.mxu0 0.0
    %318 = vmatprep.subr.mxu0 0.0
    %319 = vmatpush2.msra.mxu0 0.0
    %320 = vmatprep.subr.mxu0 0.0
    %321 = vmatpush2.msra.mxu0 0.0
    %322 = vmatprep.subr.mxu0 0.0
    %323 = vmatpush2.msra.mxu0 0.0
    %324 = vmatprep.subr.mxu0 0.0
    %325 = vmatpush2.msra.mxu0 0.0
    %326 = vmatprep.subr.mxu0 0.0
    %327 = vmatpush2.msra.mxu0 0.0
    %328 = vmatprep.subr.mxu0 0.0
    %329 = vmatpush2.msra.mxu0 0.0
    %330 = vmatprep.subr.mxu0 0.0
    %331 = vmatpush2.msra.mxu0 0.0
    %332 = vmatprep.subr.mxu0 0.0
    %333 = vmatpush2.msra.mxu0 0.0
    %334 = vmatprep.subr.mxu0 0.0
    %335 = vmatpush2.msra.mxu0 0.0
    %336 = vmatprep.subr.mxu0 0.0
    %337 = vmatpush2.msra.mxu0 0.0
    %338 = vmatprep.subr.mxu0 0.0
    %339 = vmatpush2.msra.mxu0 0.0
    %340 = vmatprep.subr.mxu0 0.0
    %341 = vmatpush2.msra.mxu0 0.0
    %342 = vmatprep.subr.mxu0 0.0
    %343 = vmatpush2.msra.mxu0 0.0
    %344 = vmatprep.subr.mxu0 0.0
    %345 = vmatpush2.msra.mxu0 0.0
    %346 = vmatprep.mubr.f32.mxu0 0.0
    %347 = vmatmul.mubr.f32.gmra.mxu0 %v258
    %v348 = vpop.f32.mrf.mxu0
    %v349 = vadd.f32 %v280, %v348
    %v350 = vpop.f32.mrf.mxu0
    %351 = vdwg.mxu0
    %352 = vst [vmem:[#allocation10] sm:$0xff] %v349
    // Predicated region
    $region46: #{tpu_custom_call.1} parent=1 // pred_check
      _
    $region47: #{tpu_custom_call.1} parent=1 // pred_check_branch
      %354 = sbr.rel (0) target = $region49
    $region48: #{tpu_custom_call.1} parent=1 // pred_region
      %s356 = ssub.s32 128, 128
      %357 = vsyncadd [#allocation4], %s356
      %s359 = sshll.u32 [#allocation10], 4
      %s360 = int_to_ptr.vmem [resolvable:$true] %s359
      %362 = dma.vmem_to_hbm [thread:$0]  %s360, 128, %s7, [#allocation4]
    $region49: #{tpu_custom_call.1} parent=1 // pred_fallthru
      _
    // Predicated region
    $region50: #{tpu_custom_call.1} parent=1 // pred_check
      _
    $region51: #{tpu_custom_call.1} parent=1 // pred_check_branch
      %364 = sbr.rel (0) target = $region53
    $region52: #{tpu_custom_call.1} parent=1 // pred_region
      %365 = dma.done [#allocation4], 128
    $region53: #{tpu_custom_call.1} parent=1 // pred_fallthru
      _
    %366 = vsyncpa [#allocation3], 1
    %367 = vsyncpa [#allocation6], 1
    %368 = vsyncpa [#allocation9], 1
    %369 = vsyncpa [#allocation4], 1

// kernel: tpu_custom_call.1
$region0: #{tpu_custom_call.1}
  #allocation0 [shape = 'u32[]', space=smem, size = 0x4, offset = 0x4, fixed_abs, tag = 'smem constant byte address 0x4 - core index']
  #allocation1 [shape = 'u32[144,128]{1,0:T(1,128)}', space=vmem, size = 0x12000, scoped, tag = 'internal scratch']
  %s0 = inlined_call_operand.hbm [shape: f32[8,16], index: 0, kind: input, shape index: {}]
  %s1 = inlined_call_operand.hbm [shape: f32[16,128], index: 1, kind: input, shape index: {}]
  %s2 = inlined_call_operand.hbm [shape: f32[128,128], index: 2, kind: input, shape index: {}]
  %s3 = inlined_call_operand.hbm [shape: f32[128,128], index: 3, kind: input, shape index: {}]
  %s4 = inlined_call_operand.vmem [shape: f32[1,128], index: 4, kind: input, shape index: {}]
  %s5 = inlined_call_operand.vmem [shape: f32[1,128], index: 5, kind: input, shape index: {}]
  %s6 = inlined_call_operand.vmem [shape: f32[1,128], index: 6, kind: input, shape index: {}]
  %s7 = inlined_call_operand.hbm [shape: f32[8,128], index: 7, kind: output, shape index: {}]
  %s8 = sld [smem:[#allocation0]]
  $region54: #{tpu_custom_call.1} parent=0
    _
  %s10 = ssub.s32 1, %s8
  %s11 = scalar_select 0, %s10, %s8
  $region1: #{tpu_custom_call.1} parent=0
    #allocation2 [shape = 'u8[4096]{0}', space=vmem, size = 0x1000, scoped, tag = 'input window, operand 0, single buffered']
    #allocation3 [shape = 's32[1]{0}', space=sflag, size = 0x4, scoped, tag = 'scoped memory for tpu_custom_call.1']
    #allocation4 [shape = 's32[1]{0}', space=sflag, size = 0x4, scoped, tag = 'scoped memory for tpu_custom_call.1']
    #allocation5 [shape = 'u8[8192]{0}', space=vmem, size = 0x2000, scoped, tag = 'input window, operand 1, single buffered']
    #allocation6 [shape = 's32[1]{0}', space=sflag, size = 0x4, scoped, tag = 'scoped memory for tpu_custom_call.1']
    #allocation7 [shape = 'u8[65536]{0}', space=vmem, size = 0x10000, scoped, tag = 'input window, operand 2, single buffered']
    #allocation8 [shape = 'u8[65536]{0}', space=vmem, size = 0x10000, scoped, tag = 'input window, operand 3, single buffered']
    #allocation9 [shape = 's32[1]{0}', space=sflag, size = 0x4, scoped, tag = 'scoped memory for tpu_custom_call.1']
    #allocation10 [shape = 'u8[4096]{0}', space=vmem, size = 0x1000, scoped, tag = 'output window, operand 0, single buffered']
    %12 = vsyncpa [#allocation3], 0
    %13 = vsyncpa [#allocation6], 0
    %14 = vsyncpa [#allocation9], 0
    %15 = vsyncpa [#allocation4], 0
    // Predicated region
    $region2: #{tpu_custom_call.1} parent=1 // pred_check
      _
    $region3: #{tpu_custom_call.1} parent=1 // pred_check_branch
      %17 = sbr.rel (0) target = $region5
    $region4: #{tpu_custom_call.1} parent=1 // pred_region
      %s19 = ssub.s32 128, 128
      %20 = vsyncadd [#allocation3], %s19
      %s22 = sshll.u32 [#allocation2], 4
      %s23 = int_to_ptr.vmem [resolvable:$true] %s22
      %25 = dma.hbm_to_vmem [thread:$0]  %s0, 128, %s23, [#allocation3]
    $region5: #{tpu_custom_call.1} parent=1 // pred_fallthru
      _
    // Predicated region
    $region6: #{tpu_custom_call.1} parent=1 // pred_check
      _
    $region7: #{tpu_custom_call.1} parent=1 // pred_check_branch
      %27 = sbr.rel (0) target = $region9
    $region8: #{tpu_custom_call.1} parent=1 // pred_region
      %s29 = ssub.s32 256, 256
      %30 = vsyncadd [#allocation6], %s29
      %s31 = sshll.u32 [#allocation5], 4
      %s32 = int_to_ptr.vmem [resolvable:$true] %s31
      %37 = dma.hbm_to_vmem [thread:$0]  %s1, 256, %s32, [#allocation6], 128, 128, 8
    $region9: #{tpu_custom_call.1} parent=1 // pred_fallthru
      _
    // Predicated region
    $region10: #{tpu_custom_call.1} parent=1 // pred_check
      _
    $region11: #{tpu_custom_call.1} parent=1 // pred_check_branch
      %39 = sbr.rel (0) target = $region13
    $region12: #{tpu_custom_call.1} parent=1 // pred_region
      %s41 = ssub.s32 2048, 2048
      %42 = vsyncadd [#allocation6], %s41
      %s43 = sshll.u32 [#allocation7], 4
      %s44 = int_to_ptr.vmem [resolvable:$true] %s43
      %49 = dma.hbm_to_vmem [thread:$0]  %s2, 2048, %s44, [#allocation6], 128, 128, 8
    $region13: #{tpu_custom_call.1} parent=1 // pred_fallthru
      _
    // Predicated region
    $region14: #{tpu_custom_call.1} parent=1 // pred_check
      _
    $region15: #{tpu_custom_call.1} parent=1 // pred_check_branch
      %51 = sbr.rel (0) target = $region17
    $region16: #{tpu_custom_call.1} parent=1 // pred_region
      %s53 = ssub.s32 2048, 2048
      %54 = vsyncadd [#allocation9], %s53
      %s55 = sshll.u32 [#allocation8], 4
      %s56 = int_to_ptr.vmem [resolvable:$true] %s55
      %61 = dma.hbm_to_vmem [thread:$0]  %s3, 2048, %s56, [#allocation9], 128, 128, 8
    $region17: #{tpu_custom_call.1} parent=1 // pred_fallthru
      _
    // Predicated region
    $region18: #{tpu_custom_call.1} parent=1 // pred_check
      _
    $region19: #{tpu_custom_call.1} parent=1 // pred_check_branch
      %63 = sbr.rel (0) target = $region21
    $region20: #{tpu_custom_call.1} parent=1 // pred_region
      _
    $region21: #{tpu_custom_call.1} parent=1 // pred_fallthru
      _
    // Predicated region
    $region22: #{tpu_custom_call.1} parent=1 // pred_check
      _
    $region23: #{tpu_custom_call.1} parent=1 // pred_check_branch
      %65 = sbr.rel (0) target = $region25
    $region24: #{tpu_custom_call.1} parent=1 // pred_region
      _
    $region25: #{tpu_custom_call.1} parent=1 // pred_fallthru
      _
    // Predicated region
    $region26: #{tpu_custom_call.1} parent=1 // pred_check
      _
    $region27: #{tpu_custom_call.1} parent=1 // pred_check_branch
      %67 = sbr.rel (0) target = $region29
    $region28: #{tpu_custom_call.1} parent=1 // pred_region
      _
    $region29: #{tpu_custom_call.1} parent=1 // pred_fallthru
      _
    // Predicated region
    $region30: #{tpu_custom_call.1} parent=1 // pred_check
      _
    $region31: #{tpu_custom_call.1} parent=1 // pred_check_branch
      %69 = sbr.rel (0) target = $region33
    $region32: #{tpu_custom_call.1} parent=1 // pred_region
      %70 = dma.done [#allocation3], 128
    $region33: #{tpu_custom_call.1} parent=1 // pred_fallthru
      _
    // Predicated region
    $region34: #{tpu_custom_call.1} parent=1 // pred_check
      _
    $region35: #{tpu_custom_call.1} parent=1 // pred_check_branch
      %72 = sbr.rel (0) target = $region37
    $region36: #{tpu_custom_call.1} parent=1 // pred_region
      %73 = dma.done [#allocation6], 256
    $region37: #{tpu_custom_call.1} parent=1 // pred_fallthru
      _
    // Predicated region
    $region38: #{tpu_custom_call.1} parent=1 // pred_check
      _
    $region39: #{tpu_custom_call.1} parent=1 // pred_check_branch
      %75 = sbr.rel (0) target = $region41
    $region40: #{tpu_custom_call.1} parent=1 // pred_region
      %76 = dma.done [#allocation6], 2048
    $region41: #{tpu_custom_call.1} parent=1 // pred_fallthru
      _
    // Predicated region
    $region42: #{tpu_custom_call.1} parent=1 // pred_check
      _
    $region43: #{tpu_custom_call.1} parent=1 // pred_check_branch
      %78 = sbr.rel (0) target = $region45
    $region44: #{tpu_custom_call.1} parent=1 // pred_region
      %79 = dma.done [#allocation9], 2048
    $region45: #{tpu_custom_call.1} parent=1 // pred_fallthru
      _
    %v80 = vld [vmem:[#allocation2] sm:$0xff]
    %v81 = vld [vmem:[#allocation5] sm:$0xff]
    %v82 = vld [vmem:[#allocation5 + $0x8] sm:$0xff]
    %v83 = vld [vmem:[%s4] sm:$0x1]
    %v85 = vlaneseq
    %v86 = vshrl.u32 %v85, 7
    %v87 = vsub.s32 0, %v86
    %v88 = vrot.slane %v83, %v87
    %vm90 = vcmask 130048
    %v92 = vsel %vm90, %v80, 0
    %94 = vmatprep.subr.mxu0 0.0
    %95 = vmatpush1.msra.mxu0 0.0
    %96 = vmatprep.subr.mxu0 0.0
    %97 = vmatpush1.msra.mxu0 0.0
    %98 = vmatprep.subr.mxu0 0.0
    %99 = vmatpush1.msra.mxu0 0.0
    %100 = vmatprep.subr.mxu0 0.0
    %101 = vmatpush1.msra.mxu0 0.0
    %102 = vmatprep.subr.mxu0 0.0
    %103 = vmatpush1.msra.mxu0 0.0
    %104 = vmatprep.subr.mxu0 0.0
    %105 = vmatpush1.msra.mxu0 0.0
    %106 = vmatprep.subr.mxu0 0.0
    %107 = vmatpush1.msra.mxu0 0.0
    %108 = vmatprep.subr.mxu0 0.0
    %109 = vmatpush1.msra.mxu0 0.0
    %110 = vmatprep.subr.mxu0 0.0
    %111 = vmatpush1.msra.mxu0 0.0
    %112 = vmatprep.subr.mxu0 0.0
    %113 = vmatpush1.msra.mxu0 0.0
    %114 = vmatprep.subr.mxu0 0.0
    %115 = vmatpush1.msra.mxu0 0.0
    %116 = vmatprep.subr.mxu0 0.0
    %117 = vmatpush1.msra.mxu0 0.0
    %118 = vmatprep.subr.mxu0 0.0
    %119 = vmatpush1.msra.mxu0 0.0
    %120 = vmatprep.subr.mxu0 0.0
    %121 = vmatpush1.msra.mxu0 0.0
    %122 = vmatprep.subr.mxu0 0.0
    %123 = vmatpush1.msra.mxu0 %v82
    %124 = vmatprep.subr.mxu0 0.0
    %125 = vmatpush1.msra.mxu0 %v81
    %126 = vmatprep.subr.mxu0 0.0
    %127 = vmatpush2.msra.mxu0 0.0
    %128 = vmatprep.subr.mxu0 0.0
    %129 = vmatpush2.msra.mxu0 0.0
    %130 = vmatprep.subr.mxu0 0.0
    %131 = vmatpush2.msra.mxu0 0.0
    %132 = vmatprep.subr.mxu0 0.0
    %133 = vmatpush2.msra.mxu0 0.0
    %134 = vmatprep.subr.mxu0 0.0
    %135 = vmatpush2.msra.mxu0 0.0
    %136 = vmatprep.subr.mxu0 0.0
    %137 = vmatpush2.msra.mxu0 0.0
    %138 = vmatprep.subr.mxu0 0.0
    %139 = vmatpush2.msra.mxu0 0.0
    %140 = vmatprep.subr.mxu0 0.0
    %141 = vmatpush2.msra.mxu0 0.0
    %142 = vmatprep.subr.mxu0 0.0
    %143 = vmatpush2.msra.mxu0 0.0
    %144 = vmatprep.subr.mxu0 0.0
    %145 = vmatpush2.msra.mxu0 0.0
    %146 = vmatprep.subr.mxu0 0.0
    %147 = vmatpush2.msra.mxu0 0.0
    %148 = vmatprep.subr.mxu0 0.0
    %149 = vmatpush2.msra.mxu0 0.0
    %150 = vmatprep.subr.mxu0 0.0
    %151 = vmatpush2.msra.mxu0 0.0
    %152 = vmatprep.subr.mxu0 0.0
    %153 = vmatpush2.msra.mxu0 0.0
    %154 = vmatprep.subr.mxu0 0.0
    %155 = vmatpush2.msra.mxu0 0.0
    %156 = vmatprep.subr.mxu0 0.0
    %157 = vmatpush2.msra.mxu0 0.0
    %158 = vmatprep.mubr.f32.mxu0 0.0
    %159 = vmatmul.mubr.f32.gmra.mxu0 %v92
    %v160 = vpop.f32.mrf.mxu0
    %v161 = vadd.f32 %v88, %v160
    %v162 = vpop.f32.mrf.mxu0
    %163 = vdwg.mxu0
    %v164 = vtanh.pop %v161
    %v165 = vld [vmem:[#allocation7] sm:$0xff]
    %v166 = vld [vmem:[#allocation7 + $0x8] sm:$0xff]
    %v167 = vld [vmem:[#allocation7 + $0x10] sm:$0xff]
    %v168 = vld [vmem:[#allocation7 + $0x18] sm:$0xff]
    %v169 = vld [vmem:[#allocation7 + $0x20] sm:$0xff]
    %v170 = vld [vmem:[#allocation7 + $0x28] sm:$0xff]
    %v171 = vld [vmem:[#allocation7 + $0x30] sm:$0xff]
    %v172 = vld [vmem:[#allocation7 + $0x38] sm:$0xff]
    %v173 = vld [vmem:[#allocation7 + $0x40] sm:$0xff]
    %v174 = vld [vmem:[#allocation7 + $0x48] sm:$0xff]
    %v175 = vld [vmem:[#allocation7 + $0x50] sm:$0xff]
    %v176 = vld [vmem:[#allocation7 + $0x58] sm:$0xff]
    %v177 = vld [vmem:[#allocation7 + $0x60] sm:$0xff]
    %v178 = vld [vmem:[#allocation7 + $0x68] sm:$0xff]
    %v179 = vld [vmem:[#allocation7 + $0x70] sm:$0xff]
    %v180 = vld [vmem:[#allocation7 + $0x78] sm:$0xff]
    %v181 = vld [vmem:[%s5] sm:$0x1]
    %v183 = vlaneseq
    %v184 = vshrl.u32 %v183, 7
    %v185 = vsub.s32 0, %v184
    %v186 = vrot.slane %v181, %v185
    %188 = vmatprep.subr.mxu0 0.0
    %189 = vmatpush1.msra.mxu0 %v180
    %190 = vmatprep.subr.mxu0 0.0
    %191 = vmatpush1.msra.mxu0 %v179
    %192 = vmatprep.subr.mxu0 0.0
    %193 = vmatpush1.msra.mxu0 %v178
    %194 = vmatprep.subr.mxu0 0.0
    %195 = vmatpush1.msra.mxu0 %v177
    %196 = vmatprep.subr.mxu0 0.0
    %197 = vmatpush1.msra.mxu0 %v176
    %198 = vmatprep.subr.mxu0 0.0
    %199 = vmatpush1.msra.mxu0 %v175
    %200 = vmatprep.subr.mxu0 0.0
    %201 = vmatpush1.msra.mxu0 %v174
    %202 = vmatprep.subr.mxu0 0.0
    %203 = vmatpush1.msra.mxu0 %v173
    %204 = vmatprep.subr.mxu0 0.0
    %205 = vmatpush1.msra.mxu0 %v172
    %206 = vmatprep.subr.mxu0 0.0
    %207 = vmatpush1.msra.mxu0 %v171
    %208 = vmatprep.subr.mxu0 0.0
    %209 = vmatpush1.msra.mxu0 %v170
    %210 = vmatprep.subr.mxu0 0.0
    %211 = vmatpush1.msra.mxu0 %v169
    %212 = vmatprep.subr.mxu0 0.0
    %213 = vmatpush1.msra.mxu0 %v168
    %214 = vmatprep.subr.mxu0 0.0
    %215 = vmatpush1.msra.mxu0 %v167
    %216 = vmatprep.subr.mxu0 0.0
    %217 = vmatpush1.msra.mxu0 %v166
    %218 = vmatprep.subr.mxu0 0.0
    %219 = vmatpush1.msra.mxu0 %v165
    %220 = vmatprep.subr.mxu0 0.0
    %221 = vmatpush2.msra.mxu0 0.0
    %222 = vmatprep.subr.mxu0 0.0
    %223 = vmatpush2.msra.mxu0 0.0
    %224 = vmatprep.subr.mxu0 0.0
    %225 = vmatpush2.msra.mxu0 0.0
    %226 = vmatprep.subr.mxu0 0.0
    %227 = vmatpush2.msra.mxu0 0.0
    %228 = vmatprep.subr.mxu0 0.0
    %229 = vmatpush2.msra.mxu0 0.0
    %230 = vmatprep.subr.mxu0 0.0
    %231 = vmatpush2.msra.mxu0 0.0
    %232 = vmatprep.subr.mxu0 0.0
    %233 = vmatpush2.msra.mxu0 0.0
    %234 = vmatprep.subr.mxu0 0.0
    %235 = vmatpush2.msra.mxu0 0.0
    %236 = vmatprep.subr.mxu0 0.0
    %237 = vmatpush2.msra.mxu0 0.0
    %238 = vmatprep.subr.mxu0 0.0
    %239 = vmatpush2.msra.mxu0 0.0
    %240 = vmatprep.subr.mxu0 0.0
    %241 = vmatpush2.msra.mxu0 0.0
    %242 = vmatprep.subr.mxu0 0.0
    %243 = vmatpush2.msra.mxu0 0.0
    %244 = vmatprep.subr.mxu0 0.0
    %245 = vmatpush2.msra.mxu0 0.0
    %246 = vmatprep.subr.mxu0 0.0
    %247 = vmatpush2.msra.mxu0 0.0
    %248 = vmatprep.subr.mxu0 0.0
    %249 = vmatpush2.msra.mxu0 0.0
    %250 = vmatprep.subr.mxu0 0.0
    %251 = vmatpush2.msra.mxu0 0.0
    %252 = vmatprep.mubr.f32.mxu0 0.0
    %253 = vmatmul.mubr.f32.gmra.mxu0 %v164
    %v254 = vpop.f32.mrf.mxu0
    %v255 = vadd.f32 %v186, %v254
    %v256 = vpop.f32.mrf.mxu0
    %257 = vdwg.mxu0
    %v258 = vtanh.pop %v255
    %v259 = vld [vmem:[#allocation8] sm:$0xff]
    %v260 = vld [vmem:[#allocation8 + $0x8] sm:$0xff]
    %v261 = vld [vmem:[#allocation8 + $0x10] sm:$0xff]
    %v262 = vld [vmem:[#allocation8 + $0x18] sm:$0xff]
    %v263 = vld [vmem:[#allocation8 + $0x20] sm:$0xff]
    %v264 = vld [vmem:[#allocation8 + $0x28] sm:$0xff]
    %v265 = vld [vmem:[#allocation8 + $0x30] sm:$0xff]
    %v266 = vld [vmem:[#allocation8 + $0x38] sm:$0xff]
    %v267 = vld [vmem:[#allocation8 + $0x40] sm:$0xff]
    %v268 = vld [vmem:[#allocation8 + $0x48] sm:$0xff]
    %v269 = vld [vmem:[#allocation8 + $0x50] sm:$0xff]
    %v270 = vld [vmem:[#allocation8 + $0x58] sm:$0xff]
    %v271 = vld [vmem:[#allocation8 + $0x60] sm:$0xff]
    %v272 = vld [vmem:[#allocation8 + $0x68] sm:$0xff]
    %v273 = vld [vmem:[#allocation8 + $0x70] sm:$0xff]
    %v274 = vld [vmem:[#allocation8 + $0x78] sm:$0xff]
    %v275 = vld [vmem:[%s6] sm:$0x1]
    %v277 = vlaneseq
    %v278 = vshrl.u32 %v277, 7
    %v279 = vsub.s32 0, %v278
    %v280 = vrot.slane %v275, %v279
    %282 = vmatprep.subr.mxu0 0.0
    %283 = vmatpush1.msra.mxu0 %v274
    %284 = vmatprep.subr.mxu0 0.0
    %285 = vmatpush1.msra.mxu0 %v273
    %286 = vmatprep.subr.mxu0 0.0
    %287 = vmatpush1.msra.mxu0 %v272
    %288 = vmatprep.subr.mxu0 0.0
    %289 = vmatpush1.msra.mxu0 %v271
    %290 = vmatprep.subr.mxu0 0.0
    %291 = vmatpush1.msra.mxu0 %v270
    %292 = vmatprep.subr.mxu0 0.0
    %293 = vmatpush1.msra.mxu0 %v269
    %294 = vmatprep.subr.mxu0 0.0
    %295 = vmatpush1.msra.mxu0 %v268
    %296 = vmatprep.subr.mxu0 0.0
    %297 = vmatpush1.msra.mxu0 %v267
    %298 = vmatprep.subr.mxu0 0.0
    %299 = vmatpush1.msra.mxu0 %v266
    %300 = vmatprep.subr.mxu0 0.0
    %301 = vmatpush1.msra.mxu0 %v265
    %302 = vmatprep.subr.mxu0 0.0
    %303 = vmatpush1.msra.mxu0 %v264
    %304 = vmatprep.subr.mxu0 0.0
    %305 = vmatpush1.msra.mxu0 %v263
    %306 = vmatprep.subr.mxu0 0.0
    %307 = vmatpush1.msra.mxu0 %v262
    %308 = vmatprep.subr.mxu0 0.0
    %309 = vmatpush1.msra.mxu0 %v261
    %310 = vmatprep.subr.mxu0 0.0
    %311 = vmatpush1.msra.mxu0 %v260
    %312 = vmatprep.subr.mxu0 0.0
    %313 = vmatpush1.msra.mxu0 %v259
    %314 = vmatprep.subr.mxu0 0.0
    %315 = vmatpush2.msra.mxu0 0.0
    %316 = vmatprep.subr.mxu0 0.0
    %317 = vmatpush2.msra.mxu0 0.0
    %318 = vmatprep.subr.mxu0 0.0
    %319 = vmatpush2.msra.mxu0 0.0
    %320 = vmatprep.subr.mxu0 0.0
    %321 = vmatpush2.msra.mxu0 0.0
    %322 = vmatprep.subr.mxu0 0.0
    %323 = vmatpush2.msra.mxu0 0.0
    %324 = vmatprep.subr.mxu0 0.0
    %325 = vmatpush2.msra.mxu0 0.0
    %326 = vmatprep.subr.mxu0 0.0
    %327 = vmatpush2.msra.mxu0 0.0
    %328 = vmatprep.subr.mxu0 0.0
    %329 = vmatpush2.msra.mxu0 0.0
    %330 = vmatprep.subr.mxu0 0.0
    %331 = vmatpush2.msra.mxu0 0.0
    %332 = vmatprep.subr.mxu0 0.0
    %333 = vmatpush2.msra.mxu0 0.0
    %334 = vmatprep.subr.mxu0 0.0
    %335 = vmatpush2.msra.mxu0 0.0
    %336 = vmatprep.subr.mxu0 0.0
    %337 = vmatpush2.msra.mxu0 0.0
    %338 = vmatprep.subr.mxu0 0.0
    %339 = vmatpush2.msra.mxu0 0.0
    %340 = vmatprep.subr.mxu0 0.0
    %341 = vmatpush2.msra.mxu0 0.0
    %342 = vmatprep.subr.mxu0 0.0
    %343 = vmatpush2.msra.mxu0 0.0
    %344 = vmatprep.subr.mxu0 0.0
    %345 = vmatpush2.msra.mxu0 0.0
    %346 = vmatprep.mubr.f32.mxu0 0.0
    %347 = vmatmul.mubr.f32.gmra.mxu0 %v258
    %v348 = vpop.f32.mrf.mxu0
    %v349 = vadd.f32 %v280, %v348
    %v350 = vpop.f32.mrf.mxu0
    %351 = vdwg.mxu0
    %352 = vst [vmem:[#allocation10] sm:$0xff] %v349
    // Predicated region
    $region46: #{tpu_custom_call.1} parent=1 // pred_check
      _
    $region47: #{tpu_custom_call.1} parent=1 // pred_check_branch
      %354 = sbr.rel (0) target = $region49
    $region48: #{tpu_custom_call.1} parent=1 // pred_region
      %s356 = ssub.s32 128, 128
      %357 = vsyncadd [#allocation4], %s356
      %s359 = sshll.u32 [#allocation10], 4
      %s360 = int_to_ptr.vmem [resolvable:$true] %s359
      %362 = dma.vmem_to_hbm [thread:$0]  %s360, 128, %s7, [#allocation4]
    $region49: #{tpu_custom_call.1} parent=1 // pred_fallthru
      _
    // Predicated region
    $region50: #{tpu_custom_call.1} parent=1 // pred_check
      _
    $region51: #{tpu_custom_call.1} parent=1 // pred_check_branch
      %364 = sbr.rel (0) target = $region53
    $region52: #{tpu_custom_call.1} parent=1 // pred_region
      %365 = dma.done [#allocation4], 128
    $region53: #{tpu_custom_call.1} parent=1 // pred_fallthru
      _
    %366 = vsyncpa [#allocation3], 1
    %367 = vsyncpa [#allocation6], 1
    %368 = vsyncpa [#allocation9], 1
    %369 = vsyncpa [#allocation4], 1

</llo_original>
